<compile_context>
chip_gen: v6e
topology: v6e:2x2x1
jax: 0.10.0
libtpu: 0.0.40
codegen_flags: <defaults>
</compile_context>

<pallas_src>
import jax
import jax.numpy as jnp
from jax.experimental import pallas as pl
from jax.experimental.pallas import tpu as pltpu

HIDDEN = 64          # matches the PyTorch module
NPACK = 2 * HIDDEN   # 128: packed lane width (actor hidden | critic lane | pad)


def _round_up(a, b):
    return (a + b - 1) // b * b


def _make_kernel(action_space, out_w, tanh_dtype, narrow):
    """Build the fused actor+critic kernel for static (A, out width, dtypes)."""
    vshift = (action_space - HIDDEN) % NPACK   # move value lane H -> lane A

    def kernel(x_ref, lane_ref, w1_ref, b1_ref, w2_ref, b2_ref, w3_ref, b3_ref,
               out_ref):
        cdt = w1_ref.dtype                     # matmul operand dtype (f32/bf16)
        x = x_ref[...].astype(cdt)

        # Layer 1: actor fc1 | critic fc1 fused -> one K=state, N=128 matmul.
        z1 = jnp.dot(x, w1_ref[...], preferred_element_type=jnp.float32) + b1_ref[...]
        a1 = jnp.tanh(z1.astype(tanh_dtype)).astype(cdt)

        # Layer 2: block-packed [128,128]: actor fc2 in [:H,:H], critic head col H.
        z2 = jnp.dot(a1, w2_ref[...], preferred_element_type=jnp.float32) + b2_ref[...]

        # f32-precision value: rotate lane H of z2 onto lane A (XLU, cheap).
        val = pltpu.roll(z2, vshift, 1)

        lane = jnp.broadcast_to(lane_ref[...], z2.shape)      # (tb, 128) int32
        z2a = z2.astype(tanh_dtype)
        a2 = jnp.where(lane < HIDDEN, jnp.tanh(z2a), z2a).astype(cdt)

        # Layer 3: actor mean head in [:H,:A]; other lanes of z3 are zero.
        z3 = jnp.dot(a2, w3_ref[...], preferred_element_type=jnp.float32) + b3_ref[...]

        merged = jnp.where(lane == action_space, val, z3)     # mean | value packed
        if narrow:
            out_ref[...] = merged[:, :out_w].astype(out_ref.dtype)
        else:
            out_ref[...] = merged.astype(out_ref.dtype)

    return kernel


def pack_policy_params(params, weights_dtype=jnp.bfloat16):
    """Pack/fuse parameters ONCE (hoist out of the per-forward path)."""
    S, H = params["w1"].shape
    A = params["w3"].shape[1]
    assert H == HIDDEN and A + 1 <= NPACK

    # Layer 1: [S, 128] = w1 | wc1 ;  bias [1, 128] = b1 | bc1.
    w1c = jnp.concatenate([params["w1"], params["wc1"]], axis=1)
    b1c = jnp.concatenate([params["b1"], params["bc1"]], axis=1)

    # Layer 2: actor fc2 block + critic value column (lane H).
    w2c = jnp.zeros((NPACK, NPACK), jnp.float32)
    w2c = w2c.at[:H, :H].set(params["w2"])
    w2c = w2c.at[H:, H].set(params["wc2"][:, 0])
    b2c = jnp.zeros((1, NPACK), jnp.float32)
    b2c = b2c.at[:, :H].set(params["b2"][0])
    b2c = b2c.at[:, H].set(params["bc2"][0, 0])

    # Layer 3: actor mean head only (value is merged in-kernel via roll+select).
    w3c = jnp.zeros((NPACK, NPACK), jnp.float32)
    w3c = w3c.at[:H, :A].set(params["w3"])
    b3c = jnp.zeros((1, NPACK), jnp.float32)
    b3c = b3c.at[:, :A].set(params["b3"][0])

    lane = jnp.arange(NPACK, dtype=jnp.int32).reshape(1, NPACK)

    return {
        # matmul operands in weights_dtype; biases stay f32 (post-accumulation).
        "w1": w1c.astype(weights_dtype), "b1": b1c,
        "w2": w2c.astype(weights_dtype), "b2": b2c,
        "w3": w3c.astype(weights_dtype), "b3": b3c,
        "lane": lane,
        "sigma": jax.nn.softplus(params["sigma"]),   # x-independent, hoisted
        "state_space": int(S),
        "action_space": int(A),
    }


def policy_forward(x, packed, *, out_dtype=None, output_mode="narrow",
                   block_rows=1024, tanh_dtype=jnp.float32):
    """Fused actor-critic forward. `packed` comes from pack_policy_params."""
    B, S = x.shape
    assert S == packed["state_space"]
    A = packed["action_space"]
    cdt = packed["w1"].dtype

    if out_dtype is None:
        out_dtype = jnp.bfloat16 if cdt == jnp.bfloat16 else jnp.float32

    narrow = (output_mode == "narrow")
    out_w = _round_up(A + 1, 8) if narrow else NPACK

    # Batch tile: multiple of 16 (covers bf16 sublane packing), large to amortize
    # the ~0.35us grid-step cost, but capped at ceil(B/2) so the grid has >= 2
    # steps whenever possible (v7x megacore split of the "parallel" axis).
    ALIGN = 16
    full = _round_up(B, ALIGN)
    half = max(_round_up(-(-B // 2), ALIGN), ALIGN)
    tb = min(_round_up(block_rows, ALIGN), full, half)
    b_pad = _round_up(B, tb)
    if b_pad != B:
        x = jnp.pad(x, ((0, b_pad - B), (0, 0)))
    grid = (b_pad // tb,)

    kernel = _make_kernel(A, out_w, tanh_dtype, narrow)

    flops = 2 * b_pad * (S * NPACK + 2 * NPACK * NPACK)
    transcendentals = 2 * b_pad * NPACK
    bytes_accessed = (
        b_pad * S * x.dtype.itemsize
        + sum(packed[k].size * packed[k].dtype.itemsize
              for k in ("w1", "b1", "w2", "b2", "w3", "b3", "lane"))
        + b_pad * out_w * jnp.dtype(out_dtype).itemsize
    )

    out = pl.pallas_call(
        kernel,
        out_shape=jax.ShapeDtypeStruct((b_pad, out_w), out_dtype),
        grid_spec=pltpu.PrefetchScalarGridSpec(
            num_scalar_prefetch=0,
            grid=grid,
            in_specs=[
                pl.BlockSpec((tb, S), lambda i: (i, 0)),          # x tile (pipelined)
                pl.BlockSpec((1, NPACK), lambda i: (0, 0)),       # lane ids (resident)
                pl.BlockSpec((S, NPACK), lambda i: (0, 0)),       # fused fc1
                pl.BlockSpec((1, NPACK), lambda i: (0, 0)),
                pl.BlockSpec((NPACK, NPACK), lambda i: (0, 0)),   # packed fc2 + value col
                pl.BlockSpec((1, NPACK), lambda i: (0, 0)),
                pl.BlockSpec((NPACK, NPACK), lambda i: (0, 0)),   # packed mean head
                pl.BlockSpec((1, NPACK), lambda i: (0, 0)),
            ],
            out_specs=pl.BlockSpec((tb, out_w), lambda i: (i, 0)),
        ),
        compiler_params=pltpu.CompilerParams(
            dimension_semantics=(pltpu.PARALLEL,),   # batch split across TCs on v7x
        ),
        cost_estimate=pl.CostEstimate(
            flops=flops,
            transcendentals=transcendentals,
            bytes_accessed=bytes_accessed,
        ),
    )(x, packed["lane"], packed["w1"], packed["b1"], packed["w2"],
      packed["b2"], packed["w3"], packed["b3"])

    # Single slice of the (already tiny) head; mean/value split is free.
    head = out[:B, :A + 1]
    action_mean = head[:, :A]
    value = head[:, A:A + 1]
    return action_mean, packed["sigma"], value


def init_params(key, state_space, action_space, hidden=HIDDEN):
    """Mirror Policy.init_weights: normal_(weight), zeros_(bias), sigma=0.5."""
    ks = jax.random.split(key, 5)
    # Weights stored as [in, out] (transpose of PyTorch's [out, in]).
    return {
        "w1": jax.random.normal(ks[0], (state_space, hidden), jnp.float32),
        "b1": jnp.zeros((1, hidden), jnp.float32),
        "w2": jax.random.normal(ks[1], (hidden, hidden), jnp.float32),
        "b2": jnp.zeros((1, hidden), jnp.float32),
        "w3": jax.random.normal(ks[2], (hidden, action_space), jnp.float32),
        "b3": jnp.zeros((1, action_space), jnp.float32),
        "sigma": jnp.full((1, action_space), 0.5, jnp.float32),
        "wc1": jax.random.normal(ks[3], (state_space, hidden), jnp.float32),
        "bc1": jnp.zeros((1, hidden), jnp.float32),
        "wc2": jax.random.normal(ks[4], (hidden, 1), jnp.float32),
        "bc2": jnp.zeros((1, 1), jnp.float32),
    }


if __name__ == "__main__":
    state_space = 8
    action_space = 4
    batch = 2

    key = jax.random.PRNGKey(0)
    k_x, k_p, k_big = jax.random.split(key, 3)

    x = jax.random.normal(k_x, (batch, state_space), jnp.float32)
    params = init_params(k_p, state_space, action_space)

    # Pure-JAX reference (highest precision).
    def ref(x, p):
        hp = jax.lax.Precision.HIGHEST
        h1 = jnp.tanh(jnp.dot(x, p["w1"], precision=hp) + p["b1"])
        h2 = jnp.tanh(jnp.dot(h1, p["w2"], precision=hp) + p["b2"])
        mean = jnp.dot(h2, p["w3"], precision=hp) + p["b3"]
        sig = jax.nn.softplus(p["sigma"])
        c1 = jnp.tanh(jnp.dot(x, p["wc1"], precision=hp) + p["bc1"])
        val = jnp.dot(c1, p["wc2"], precision=hp) + p["bc2"]
        return mean, sig, val

    rm, rs, rv = ref(x, params)

    # Pack once per weights dtype (hoisted out of the forward path).
    packed_f32 = pack_policy_params(params, weights_dtype=jnp.float32)
    packed_bf16 = pack_policy_params(params, weights_dtype=jnp.bfloat16)

    # 1) f32 weights, narrow output (default): tight correctness check.
    m32, s32, v32 = policy_forward(x, packed_f32)
    jax.block_until_ready((m32, s32, v32))
    assert jnp.allclose(m32, rm, atol=1e-3, rtol=1e-3)
    assert jnp.allclose(s32, rs, atol=1e-5)
    assert jnp.allclose(v32, rv, atol=1e-3, rtol=1e-3)

    # 2) f32 weights, lane-dense packed output slab (A/B variant).
    mp, sp, vp = policy_forward(x, packed_f32, output_mode="packed")
    jax.block_until_ready((mp, sp, vp))
    assert jnp.allclose(mp, rm, atol=1e-3, rtol=1e-3)
    assert jnp.allclose(vp, rv, atol=1e-3, rtol=1e-3)

    # 3) Default bf16-weight / bf16-output fast path: loose check.
    m16, s16, v16 = policy_forward(x, packed_bf16)
    jax.block_until_ready((m16, s16, v16))
    assert jnp.allclose(m16.astype(jnp.float32), rm, atol=1e-1, rtol=1e-1)
    assert jnp.allclose(s16, rs, atol=1e-5)
    assert jnp.allclose(v16.astype(jnp.float32), rv, atol=1e-1, rtol=1e-1)

    # 4) Larger, non-tile-multiple batch: exercises padding + multi-step grid.
    xb = jax.random.normal(k_big, (300, state_space), jnp.float32)
    mb, sb, vb = policy_forward(xb, packed_f32)
    jax.block_until_ready((mb, sb, vb))
    rmb, _, rvb = ref(xb, params)
    assert jnp.allclose(mb, rmb, atol=1e-3, rtol=1e-3)
    assert jnp.allclose(vb, rvb, atol=1e-3, rtol=1e-3)

    print("KERNEL_OK")
</pallas_src>

<mosaic_0001>
module attributes {stable_mosaic.version = 11 : i64} {
  func.func @kernel(%arg0: i32, %arg1: memref<16x8xf32, #tpu.memory_space<vmem>>, %arg2: memref<1x128xi32, #tpu.memory_space<vmem>>, %arg3: memref<8x128xf32, #tpu.memory_space<vmem>>, %arg4: memref<1x128xf32, #tpu.memory_space<vmem>>, %arg5: memref<128x128xf32, #tpu.memory_space<vmem>>, %arg6: memref<1x128xf32, #tpu.memory_space<vmem>>, %arg7: memref<128x128xf32, #tpu.memory_space<vmem>>, %arg8: memref<1x128xf32, #tpu.memory_space<vmem>>, %arg9: memref<16x8xf32, #tpu.memory_space<vmem>>) attributes {dimension_semantics = [#tpu.dimension_semantics<parallel>], iteration_bounds = array<i64: 1>, scalar_prefetch = 0 : i64, scratch_operands = 0 : i64, tpu.core_type = #tpu.core_type<tc>, window_params = [{transform_indices = @transform_0, window_bounds = array<i64: 16, 8>}, {pipeline_mode = #tpu.pipeline_mode<synchronous>, transform_indices = @transform_1, window_bounds = array<i64: 1, 128>}, {pipeline_mode = #tpu.pipeline_mode<synchronous>, transform_indices = @transform_2, window_bounds = array<i64: 8, 128>}, {pipeline_mode = #tpu.pipeline_mode<synchronous>, transform_indices = @transform_3, window_bounds = array<i64: 1, 128>}, {pipeline_mode = #tpu.pipeline_mode<synchronous>, transform_indices = @transform_4, window_bounds = array<i64: 128, 128>}, {pipeline_mode = #tpu.pipeline_mode<synchronous>, transform_indices = @transform_5, window_bounds = array<i64: 1, 128>}, {pipeline_mode = #tpu.pipeline_mode<synchronous>, transform_indices = @transform_6, window_bounds = array<i64: 128, 128>}, {pipeline_mode = #tpu.pipeline_mode<synchronous>, transform_indices = @transform_7, window_bounds = array<i64: 1, 128>}, {transform_indices = @transform_8, window_bounds = array<i64: 16, 8>}]} {
    %c0 = arith.constant 0 : index
    %c0_0 = arith.constant 0 : index
    %0 = vector.load %arg1[%c0, %c0_0] : memref<16x8xf32, #tpu.memory_space<vmem>>, vector<16x8xf32>
    %c0_1 = arith.constant 0 : index
    %c0_2 = arith.constant 0 : index
    %1 = vector.load %arg3[%c0_1, %c0_2] : memref<8x128xf32, #tpu.memory_space<vmem>>, vector<8x128xf32>
    %cst = arith.constant dense<0.000000e+00> : vector<16x128xf32>
    %2 = tpu.matmul %0, %1, %cst {dimension_numbers = #tpu.dot_dimension_numbers<[1], [0], [0], [1], [0, 0, 1, 1], [], []>} : vector<16x8xf32>, vector<8x128xf32>, vector<16x128xf32> -> vector<16x128xf32>
    %c0_3 = arith.constant 0 : index
    %c0_4 = arith.constant 0 : index
    %3 = vector.load %arg4[%c0_3, %c0_4] : memref<1x128xf32, #tpu.memory_space<vmem>>, vector<1x128xf32>
    %4 = vector.broadcast %3 : vector<1x128xf32> to vector<16x128xf32>
    %5 = arith.addf %2, %4 : vector<16x128xf32>
    %6 = math.tanh %5 : vector<16x128xf32>
    %c0_5 = arith.constant 0 : index
    %c0_6 = arith.constant 0 : index
    %7 = vector.load %arg5[%c0_5, %c0_6] : memref<128x128xf32, #tpu.memory_space<vmem>>, vector<128x128xf32>
    %cst_7 = arith.constant dense<0.000000e+00> : vector<16x128xf32>
    %8 = tpu.matmul %6, %7, %cst_7 {dimension_numbers = #tpu.dot_dimension_numbers<[1], [0], [0], [1], [0, 0, 1, 1], [], []>} : vector<16x128xf32>, vector<128x128xf32>, vector<16x128xf32> -> vector<16x128xf32>
    %c0_8 = arith.constant 0 : index
    %c0_9 = arith.constant 0 : index
    %9 = vector.load %arg6[%c0_8, %c0_9] : memref<1x128xf32, #tpu.memory_space<vmem>>, vector<1x128xf32>
    %10 = vector.broadcast %9 : vector<1x128xf32> to vector<16x128xf32>
    %11 = arith.addf %8, %10 : vector<16x128xf32>
    %c68_i32 = arith.constant 68 : i32
    %12 = tpu.dynamic_rotate %11 by %c68_i32 dim 1 : vector<16x128xf32>, i32 -> vector<16x128xf32>
    %c0_10 = arith.constant 0 : index
    %c0_11 = arith.constant 0 : index
    %13 = vector.load %arg2[%c0_10, %c0_11] : memref<1x128xi32, #tpu.memory_space<vmem>>, vector<1x128xi32>
    %14 = vector.shape_cast %13 : vector<1x128xi32> to vector<1x128xi32>
    %15 = vector.broadcast %14 : vector<1x128xi32> to vector<16x128xi32>
    %c64_i32 = arith.constant 64 : i32
    %16 = vector.broadcast %c64_i32 : i32 to vector<16x128xi32>
    %17 = arith.cmpi slt, %15, %16 : vector<16x128xi32>
    %18 = math.tanh %11 : vector<16x128xf32>
    %19 = arith.select %17, %18, %11 : vector<16x128xi1>, vector<16x128xf32>
    %c0_12 = arith.constant 0 : index
    %c0_13 = arith.constant 0 : index
    %20 = vector.load %arg7[%c0_12, %c0_13] : memref<128x128xf32, #tpu.memory_space<vmem>>, vector<128x128xf32>
    %cst_14 = arith.constant dense<0.000000e+00> : vector<16x128xf32>
    %21 = tpu.matmul %19, %20, %cst_14 {dimension_numbers = #tpu.dot_dimension_numbers<[1], [0], [0], [1], [0, 0, 1, 1], [], []>} : vector<16x128xf32>, vector<128x128xf32>, vector<16x128xf32> -> vector<16x128xf32>
    %c0_15 = arith.constant 0 : index
    %c0_16 = arith.constant 0 : index
    %22 = vector.load %arg8[%c0_15, %c0_16] : memref<1x128xf32, #tpu.memory_space<vmem>>, vector<1x128xf32>
    %23 = vector.broadcast %22 : vector<1x128xf32> to vector<16x128xf32>
    %24 = arith.addf %21, %23 : vector<16x128xf32>
    %c4_i32 = arith.constant 4 : i32
    %25 = vector.broadcast %c4_i32 : i32 to vector<16x128xi32>
    %26 = arith.cmpi eq, %15, %25 : vector<16x128xi32>
    %27 = arith.select %26, %12, %24 : vector<16x128xi1>, vector<16x128xf32>
    %28 = vector.extract_strided_slice %27 {offsets = [0, 0], sizes = [16, 8], strides = [1, 1]} : vector<16x128xf32> to vector<16x8xf32>
    %c0_17 = arith.constant 0 : index
    %c0_18 = arith.constant 0 : index
    %29 = vector.load %arg9[%c0_17, %c0_18] : memref<16x8xf32, #tpu.memory_space<vmem>>, vector<16x8xf32>
    tpu.vector_store %arg9[%c0_17, %c0_18], %28 {strides = array<i32>} : memref<16x8xf32, #tpu.memory_space<vmem>>, vector<16x8xf32>,
    return
  }
  func.func @transform_0(%arg0: i32) -> (i32, i32) {
    %c0_i32 = arith.constant 0 : i32
    %c0_i32_0 = arith.constant 0 : i32
    return %arg0, %c0_i32 : i32, i32
  }
  func.func @transform_1(%arg0: i32) -> (i32, i32) {
    %c0_i32 = arith.constant 0 : i32
    %c0_i32_0 = arith.constant 0 : i32
    %c0_i32_1 = arith.constant 0 : i32
    return %c0_i32, %c0_i32_0 : i32, i32
  }
  func.func @transform_2(%arg0: i32) -> (i32, i32) {
    %c0_i32 = arith.constant 0 : i32
    %c0_i32_0 = arith.constant 0 : i32
    %c0_i32_1 = arith.constant 0 : i32
    return %c0_i32, %c0_i32_0 : i32, i32
  }
  func.func @transform_3(%arg0: i32) -> (i32, i32) {
    %c0_i32 = arith.constant 0 : i32
    %c0_i32_0 = arith.constant 0 : i32
    %c0_i32_1 = arith.constant 0 : i32
    return %c0_i32, %c0_i32_0 : i32, i32
  }
  func.func @transform_4(%arg0: i32) -> (i32, i32) {
    %c0_i32 = arith.constant 0 : i32
    %c0_i32_0 = arith.constant 0 : i32
    %c0_i32_1 = arith.constant 0 : i32
    return %c0_i32, %c0_i32_0 : i32, i32
  }
  func.func @transform_5(%arg0: i32) -> (i32, i32) {
    %c0_i32 = arith.constant 0 : i32
    %c0_i32_0 = arith.constant 0 : i32
    %c0_i32_1 = arith.constant 0 : i32
    return %c0_i32, %c0_i32_0 : i32, i32
  }
  func.func @transform_6(%arg0: i32) -> (i32, i32) {
    %c0_i32 = arith.constant 0 : i32
    %c0_i32_0 = arith.constant 0 : i32
    %c0_i32_1 = arith.constant 0 : i32
    return %c0_i32, %c0_i32_0 : i32, i32
  }
  func.func @transform_7(%arg0: i32) -> (i32, i32) {
    %c0_i32 = arith.constant 0 : i32
    %c0_i32_0 = arith.constant 0 : i32
    %c0_i32_1 = arith.constant 0 : i32
    return %c0_i32, %c0_i32_0 : i32, i32
  }
  func.func @transform_8(%arg0: i32) -> (i32, i32) {
    %c0_i32 = arith.constant 0 : i32
    %c0_i32_0 = arith.constant 0 : i32
    return %arg0, %c0_i32 : i32, i32
  }
}

</mosaic_0001>

<llo_original>
// kernel: tpu_custom_call.1
$region0: #{tpu_custom_call.1}
  #allocation0 [shape = 'u32[]', space=smem, size = 0x4, offset = 0x4, fixed_abs, tag = 'smem constant byte address 0x4 - core index']
  #allocation1 [shape = 'u32[144,128]{1,0:T(1,128)}', space=vmem, size = 0x12000, scoped, tag = 'internal scratch']
  %s0 = inlined_call_operand.vmem [shape: f32[16,8], index: 0, kind: input, shape index: {}]
  %s1 = inlined_call_operand.vmem [shape: s32[1,128], index: 1, kind: input, shape index: {}]
  %s2 = inlined_call_operand.vmem [shape: f32[8,128], index: 2, kind: input, shape index: {}]
  %s3 = inlined_call_operand.vmem [shape: f32[1,128], index: 3, kind: input, shape index: {}]
  %s4 = inlined_call_operand.hbm [shape: f32[128,128], index: 4, kind: input, shape index: {}]
  %s5 = inlined_call_operand.vmem [shape: f32[1,128], index: 5, kind: input, shape index: {}]
  %s6 = inlined_call_operand.hbm [shape: f32[128,128], index: 6, kind: input, shape index: {}]
  %s7 = inlined_call_operand.vmem [shape: f32[1,128], index: 7, kind: input, shape index: {}]
  %s8 = inlined_call_operand.vmem [shape: f32[16,8], index: 8, kind: output, shape index: {}]
  %s9 = sld [smem:[#allocation0]]
  $region50: #{tpu_custom_call.1} parent=0
    _
  %s11 = ssub.s32 1, %s9
  %s12 = scalar_select 0, %s11, %s9
  $region1: #{tpu_custom_call.1} parent=0
    #allocation2 [shape = 'u8[65536]{0}', space=vmem, size = 0x10000, scoped, tag = 'input window, operand 4, single buffered']
    #allocation3 [shape = 's32[1]{0}', space=sflag, size = 0x4, scoped, tag = 'scoped memory for tpu_custom_call.1']
    #allocation4 [shape = 'u8[65536]{0}', space=vmem, size = 0x10000, scoped, tag = 'input window, operand 6, single buffered']
    #allocation5 [shape = 's32[1]{0}', space=sflag, size = 0x4, scoped, tag = 'scoped memory for tpu_custom_call.1']
    %13 = vsyncpa [#allocation3], 0
    %14 = vsyncpa [#allocation5], 0
    // Predicated region
    $region2: #{tpu_custom_call.1} parent=1 // pred_check
      _
    $region3: #{tpu_custom_call.1} parent=1 // pred_check_branch
      %16 = sbr.rel (0) target = $region5
    $region4: #{tpu_custom_call.1} parent=1 // pred_region
      _
    $region5: #{tpu_custom_call.1} parent=1 // pred_fallthru
      _
    // Predicated region
    $region6: #{tpu_custom_call.1} parent=1 // pred_check
      _
    $region7: #{tpu_custom_call.1} parent=1 // pred_check_branch
      %18 = sbr.rel (0) target = $region9
    $region8: #{tpu_custom_call.1} parent=1 // pred_region
      _
    $region9: #{tpu_custom_call.1} parent=1 // pred_fallthru
      _
    // Predicated region
    $region10: #{tpu_custom_call.1} parent=1 // pred_check
      _
    $region11: #{tpu_custom_call.1} parent=1 // pred_check_branch
      %20 = sbr.rel (0) target = $region13
    $region12: #{tpu_custom_call.1} parent=1 // pred_region
      _
    $region13: #{tpu_custom_call.1} parent=1 // pred_fallthru
      _
    // Predicated region
    $region14: #{tpu_custom_call.1} parent=1 // pred_check
      _
    $region15: #{tpu_custom_call.1} parent=1 // pred_check_branch
      %22 = sbr.rel (0) target = $region17
    $region16: #{tpu_custom_call.1} parent=1 // pred_region
      _
    $region17: #{tpu_custom_call.1} parent=1 // pred_fallthru
      _
    // Predicated region
    $region18: #{tpu_custom_call.1} parent=1 // pred_check
      _
    $region19: #{tpu_custom_call.1} parent=1 // pred_check_branch
      %24 = sbr.rel (0) target = $region21
    $region20: #{tpu_custom_call.1} parent=1 // pred_region
      %s26 = ssub.s32 2048, 2048
      %27 = vsyncadd [#allocation3], %s26
      %s28 = sshll.u32 [#allocation2], 4
      %s29 = int_to_ptr.vmem [resolvable:$true] %s28
      %34 = dma.hbm_to_vmem [thread:$0]  %s4, 2048, %s29, [#allocation3], 128, 128, 8
    $region21: #{tpu_custom_call.1} parent=1 // pred_fallthru
      _
    // Predicated region
    $region22: #{tpu_custom_call.1} parent=1 // pred_check
      _
    $region23: #{tpu_custom_call.1} parent=1 // pred_check_branch
      %36 = sbr.rel (0) target = $region25
    $region24: #{tpu_custom_call.1} parent=1 // pred_region
      _
    $region25: #{tpu_custom_call.1} parent=1 // pred_fallthru
      _
    // Predicated region
    $region26: #{tpu_custom_call.1} parent=1 // pred_check
      _
    $region27: #{tpu_custom_call.1} parent=1 // pred_check_branch
      %38 = sbr.rel (0) target = $region29
    $region28: #{tpu_custom_call.1} parent=1 // pred_region
      %s40 = ssub.s32 2048, 2048
      %41 = vsyncadd [#allocation5], %s40
      %s42 = sshll.u32 [#allocation4], 4
      %s43 = int_to_ptr.vmem [resolvable:$true] %s42
      %48 = dma.hbm_to_vmem [thread:$0]  %s6, 2048, %s43, [#allocation5], 128, 128, 8
    $region29: #{tpu_custom_call.1} parent=1 // pred_fallthru
      _
    // Predicated region
    $region30: #{tpu_custom_call.1} parent=1 // pred_check
      _
    $region31: #{tpu_custom_call.1} parent=1 // pred_check_branch
      %50 = sbr.rel (0) target = $region33
    $region32: #{tpu_custom_call.1} parent=1 // pred_region
      _
    $region33: #{tpu_custom_call.1} parent=1 // pred_fallthru
      _
    // Predicated region
    $region34: #{tpu_custom_call.1} parent=1 // pred_check
      _
    $region35: #{tpu_custom_call.1} parent=1 // pred_check_branch
      %52 = sbr.rel (0) target = $region37
    $region36: #{tpu_custom_call.1} parent=1 // pred_region
      %53 = dma.done [#allocation3], 2048
    $region37: #{tpu_custom_call.1} parent=1 // pred_fallthru
      _
    // Predicated region
    $region38: #{tpu_custom_call.1} parent=1 // pred_check
      _
    $region39: #{tpu_custom_call.1} parent=1 // pred_check_branch
      %55 = sbr.rel (0) target = $region41
    $region40: #{tpu_custom_call.1} parent=1 // pred_region
      %56 = dma.done [#allocation5], 2048
    $region41: #{tpu_custom_call.1} parent=1 // pred_fallthru
      _
    %v57 = vld [vmem:[%s0] sm:$0xff]
    %v58 = vld [vmem:[%s0 + $0x8] sm:$0xff]
    %v59 = vld [vmem:[%s2] sm:$0xff]
    %v60 = vld [vmem:[%s3] sm:$0x1]
    %v62 = vlaneseq
    %v63 = vshrl.u32 %v62, 7
    %v64 = vsub.s32 0, %v63
    %v65 = vrot.slane %v60, %v64
    %vm67 = vcmask 64512
    %v69 = vsel %vm67, %v57, 0
    %v72 = vsel %vm67, %v58, 0
    %74 = vmatprep.subr.mxu0 0.0
    %75 = vmatpush1.msra.mxu0 0.0
    %76 = vmatprep.subr.mxu0 0.0
    %77 = vmatpush1.msra.mxu0 0.0
    %78 = vmatprep.subr.mxu0 0.0
    %79 = vmatpush1.msra.mxu0 0.0
    %80 = vmatprep.subr.mxu0 0.0
    %81 = vmatpush1.msra.mxu0 0.0
    %82 = vmatprep.subr.mxu0 0.0
    %83 = vmatpush1.msra.mxu0 0.0
    %84 = vmatprep.subr.mxu0 0.0
    %85 = vmatpush1.msra.mxu0 0.0
    %86 = vmatprep.subr.mxu0 0.0
    %87 = vmatpush1.msra.mxu0 0.0
    %88 = vmatprep.subr.mxu0 0.0
    %89 = vmatpush1.msra.mxu0 0.0
    %90 = vmatprep.subr.mxu0 0.0
    %91 = vmatpush1.msra.mxu0 0.0
    %92 = vmatprep.subr.mxu0 0.0
    %93 = vmatpush1.msra.mxu0 0.0
    %94 = vmatprep.subr.mxu0 0.0
    %95 = vmatpush1.msra.mxu0 0.0
    %96 = vmatprep.subr.mxu0 0.0
    %97 = vmatpush1.msra.mxu0 0.0
    %98 = vmatprep.subr.mxu0 0.0
    %99 = vmatpush1.msra.mxu0 0.0
    %100 = vmatprep.subr.mxu0 0.0
    %101 = vmatpush1.msra.mxu0 0.0
    %102 = vmatprep.subr.mxu0 0.0
    %103 = vmatpush1.msra.mxu0 0.0
    %104 = vmatprep.subr.mxu0 0.0
    %105 = vmatpush1.msra.mxu0 %v59
    %106 = vmatprep.subr.mxu0 0.0
    %107 = vmatpush2.msra.mxu0 0.0
    %108 = vmatprep.subr.mxu0 0.0
    %109 = vmatpush2.msra.mxu0 0.0
    %110 = vmatprep.subr.mxu0 0.0
    %111 = vmatpush2.msra.mxu0 0.0
    %112 = vmatprep.subr.mxu0 0.0
    %113 = vmatpush2.msra.mxu0 0.0
    %114 = vmatprep.subr.mxu0 0.0
    %115 = vmatpush2.msra.mxu0 0.0
    %116 = vmatprep.subr.mxu0 0.0
    %117 = vmatpush2.msra.mxu0 0.0
    %118 = vmatprep.subr.mxu0 0.0
    %119 = vmatpush2.msra.mxu0 0.0
    %120 = vmatprep.subr.mxu0 0.0
    %121 = vmatpush2.msra.mxu0 0.0
    %122 = vmatprep.subr.mxu0 0.0
    %123 = vmatpush2.msra.mxu0 0.0
    %124 = vmatprep.subr.mxu0 0.0
    %125 = vmatpush2.msra.mxu0 0.0
    %126 = vmatprep.subr.mxu0 0.0
    %127 = vmatpush2.msra.mxu0 0.0
    %128 = vmatprep.subr.mxu0 0.0
    %129 = vmatpush2.msra.mxu0 0.0
    %130 = vmatprep.subr.mxu0 0.0
    %131 = vmatpush2.msra.mxu0 0.0
    %132 = vmatprep.subr.mxu0 0.0
    %133 = vmatpush2.msra.mxu0 0.0
    %134 = vmatprep.subr.mxu0 0.0
    %135 = vmatpush2.msra.mxu0 0.0
    %136 = vmatprep.subr.mxu0 0.0
    %137 = vmatpush2.msra.mxu0 0.0
    %138 = vmatprep.mubr.f32.mxu0 0.0
    %139 = vmatmul.mubr.f32.gmra.mxu0 %v69
    %v140 = vpop.f32.mrf.mxu0
    %v141 = vadd.f32 %v65, %v140
    %v142 = vpop.f32.mrf.mxu0
    %143 = vmatprep.mubr.f32.mxu0 0.0
    %144 = vmatmul.mubr.f32.gmra.mxu0 %v72
    %v145 = vpop.f32.mrf.mxu0
    %v146 = vadd.f32 %v65, %v145
    %v147 = vpop.f32.mrf.mxu0
    %148 = vdwg.mxu0
    %v149 = vtanh.pop %v141
    %v150 = vtanh.pop %v146
    %v151 = vld [vmem:[#allocation2] sm:$0xff]
    %v152 = vld [vmem:[#allocation2 + $0x8] sm:$0xff]
    %v153 = vld [vmem:[#allocation2 + $0x10] sm:$0xff]
    %v154 = vld [vmem:[#allocation2 + $0x18] sm:$0xff]
    %v155 = vld [vmem:[#allocation2 + $0x20] sm:$0xff]
    %v156 = vld [vmem:[#allocation2 + $0x28] sm:$0xff]
    %v157 = vld [vmem:[#allocation2 + $0x30] sm:$0xff]
    %v158 = vld [vmem:[#allocation2 + $0x38] sm:$0xff]
    %v159 = vld [vmem:[#allocation2 + $0x40] sm:$0xff]
    %v160 = vld [vmem:[#allocation2 + $0x48] sm:$0xff]
    %v161 = vld [vmem:[#allocation2 + $0x50] sm:$0xff]
    %v162 = vld [vmem:[#allocation2 + $0x58] sm:$0xff]
    %v163 = vld [vmem:[#allocation2 + $0x60] sm:$0xff]
    %v164 = vld [vmem:[#allocation2 + $0x68] sm:$0xff]
    %v165 = vld [vmem:[#allocation2 + $0x70] sm:$0xff]
    %v166 = vld [vmem:[#allocation2 + $0x78] sm:$0xff]
    %v167 = vld [vmem:[%s5] sm:$0x1]
    %v169 = vlaneseq
    %v170 = vshrl.u32 %v169, 7
    %v171 = vsub.s32 0, %v170
    %v172 = vrot.slane %v167, %v171
    %174 = vmatprep.subr.mxu0 0.0
    %175 = vmatpush1.msra.mxu0 %v166
    %176 = vmatprep.subr.mxu0 0.0
    %177 = vmatpush1.msra.mxu0 %v165
    %178 = vmatprep.subr.mxu0 0.0
    %179 = vmatpush1.msra.mxu0 %v164
    %180 = vmatprep.subr.mxu0 0.0
    %181 = vmatpush1.msra.mxu0 %v163
    %182 = vmatprep.subr.mxu0 0.0
    %183 = vmatpush1.msra.mxu0 %v162
    %184 = vmatprep.subr.mxu0 0.0
    %185 = vmatpush1.msra.mxu0 %v161
    %186 = vmatprep.subr.mxu0 0.0
    %187 = vmatpush1.msra.mxu0 %v160
    %188 = vmatprep.subr.mxu0 0.0
    %189 = vmatpush1.msra.mxu0 %v159
    %190 = vmatprep.subr.mxu0 0.0
    %191 = vmatpush1.msra.mxu0 %v158
    %192 = vmatprep.subr.mxu0 0.0
    %193 = vmatpush1.msra.mxu0 %v157
    %194 = vmatprep.subr.mxu0 0.0
    %195 = vmatpush1.msra.mxu0 %v156
    %196 = vmatprep.subr.mxu0 0.0
    %197 = vmatpush1.msra.mxu0 %v155
    %198 = vmatprep.subr.mxu0 0.0
    %199 = vmatpush1.msra.mxu0 %v154
    %200 = vmatprep.subr.mxu0 0.0
    %201 = vmatpush1.msra.mxu0 %v153
    %202 = vmatprep.subr.mxu0 0.0
    %203 = vmatpush1.msra.mxu0 %v152
    %204 = vmatprep.subr.mxu0 0.0
    %205 = vmatpush1.msra.mxu0 %v151
    %206 = vmatprep.subr.mxu0 0.0
    %207 = vmatpush2.msra.mxu0 0.0
    %208 = vmatprep.subr.mxu0 0.0
    %209 = vmatpush2.msra.mxu0 0.0
    %210 = vmatprep.subr.mxu0 0.0
    %211 = vmatpush2.msra.mxu0 0.0
    %212 = vmatprep.subr.mxu0 0.0
    %213 = vmatpush2.msra.mxu0 0.0
    %214 = vmatprep.subr.mxu0 0.0
    %215 = vmatpush2.msra.mxu0 0.0
    %216 = vmatprep.subr.mxu0 0.0
    %217 = vmatpush2.msra.mxu0 0.0
    %218 = vmatprep.subr.mxu0 0.0
    %219 = vmatpush2.msra.mxu0 0.0
    %220 = vmatprep.subr.mxu0 0.0
    %221 = vmatpush2.msra.mxu0 0.0
    %222 = vmatprep.subr.mxu0 0.0
    %223 = vmatpush2.msra.mxu0 0.0
    %224 = vmatprep.subr.mxu0 0.0
    %225 = vmatpush2.msra.mxu0 0.0
    %226 = vmatprep.subr.mxu0 0.0
    %227 = vmatpush2.msra.mxu0 0.0
    %228 = vmatprep.subr.mxu0 0.0
    %229 = vmatpush2.msra.mxu0 0.0
    %230 = vmatprep.subr.mxu0 0.0
    %231 = vmatpush2.msra.mxu0 0.0
    %232 = vmatprep.subr.mxu0 0.0
    %233 = vmatpush2.msra.mxu0 0.0
    %234 = vmatprep.subr.mxu0 0.0
    %235 = vmatpush2.msra.mxu0 0.0
    %236 = vmatprep.subr.mxu0 0.0
    %237 = vmatpush2.msra.mxu0 0.0
    %238 = vmatprep.mubr.f32.mxu0 0.0
    %239 = vmatmul.mubr.f32.gmra.mxu0 %v149
    %v240 = vpop.f32.mrf.mxu0
    %v241 = vadd.f32 %v172, %v240
    %v242 = vpop.f32.mrf.mxu0
    %243 = vmatprep.mubr.f32.mxu0 0.0
    %244 = vmatmul.mubr.f32.gmra.mxu0 %v150
    %v245 = vpop.f32.mrf.mxu0
    %v246 = vadd.f32 %v172, %v245
    %v247 = vpop.f32.mrf.mxu0
    %248 = vdwg.mxu0
    %249 = vrot.lane.b32.xlu0 %v241, 68
    %v250 = vpop.permute.xlu0 %249
    %251 = vrot.lane.b32.xlu0 %v246, 68
    %v252 = vpop.permute.xlu0 %251
    %v253 = vld [vmem:[%s1] sm:$0x1]
    %v254 = vlaneseq
    %v255 = vshrl.u32 %v254, 7
    %v256 = vsub.s32 0, %v255
    %v257 = vrot.slane %v253, %v256
    %vm258 = vcmp.lt.s32.totalorder %v257, 64
    %v259 = vtanh.pop %v241
    %v260 = vtanh.pop %v246
    %v261 = vsel %vm258, %v259, %v241
    %v262 = vsel %vm258, %v260, %v246
    %v263 = vld [vmem:[#allocation4] sm:$0xff]
    %v264 = vld [vmem:[#allocation4 + $0x8] sm:$0xff]
    %v265 = vld [vmem:[#allocation4 + $0x10] sm:$0xff]
    %v266 = vld [vmem:[#allocation4 + $0x18] sm:$0xff]
    %v267 = vld [vmem:[#allocation4 + $0x20] sm:$0xff]
    %v268 = vld [vmem:[#allocation4 + $0x28] sm:$0xff]
    %v269 = vld [vmem:[#allocation4 + $0x30] sm:$0xff]
    %v270 = vld [vmem:[#allocation4 + $0x38] sm:$0xff]
    %v271 = vld [vmem:[#allocation4 + $0x40] sm:$0xff]
    %v272 = vld [vmem:[#allocation4 + $0x48] sm:$0xff]
    %v273 = vld [vmem:[#allocation4 + $0x50] sm:$0xff]
    %v274 = vld [vmem:[#allocation4 + $0x58] sm:$0xff]
    %v275 = vld [vmem:[#allocation4 + $0x60] sm:$0xff]
    %v276 = vld [vmem:[#allocation4 + $0x68] sm:$0xff]
    %v277 = vld [vmem:[#allocation4 + $0x70] sm:$0xff]
    %v278 = vld [vmem:[#allocation4 + $0x78] sm:$0xff]
    %v279 = vld [vmem:[%s7] sm:$0x1]
    %v281 = vlaneseq
    %v282 = vshrl.u32 %v281, 7
    %v283 = vsub.s32 0, %v282
    %v284 = vrot.slane %v279, %v283
    %286 = vmatprep.subr.mxu0 0.0
    %287 = vmatpush1.msra.mxu0 %v278
    %288 = vmatprep.subr.mxu0 0.0
    %289 = vmatpush1.msra.mxu0 %v277
    %290 = vmatprep.subr.mxu0 0.0
    %291 = vmatpush1.msra.mxu0 %v276
    %292 = vmatprep.subr.mxu0 0.0
    %293 = vmatpush1.msra.mxu0 %v275
    %294 = vmatprep.subr.mxu0 0.0
    %295 = vmatpush1.msra.mxu0 %v274
    %296 = vmatprep.subr.mxu0 0.0
    %297 = vmatpush1.msra.mxu0 %v273
    %298 = vmatprep.subr.mxu0 0.0
    %299 = vmatpush1.msra.mxu0 %v272
    %300 = vmatprep.subr.mxu0 0.0
    %301 = vmatpush1.msra.mxu0 %v271
    %302 = vmatprep.subr.mxu0 0.0
    %303 = vmatpush1.msra.mxu0 %v270
    %304 = vmatprep.subr.mxu0 0.0
    %305 = vmatpush1.msra.mxu0 %v269
    %306 = vmatprep.subr.mxu0 0.0
    %307 = vmatpush1.msra.mxu0 %v268
    %308 = vmatprep.subr.mxu0 0.0
    %309 = vmatpush1.msra.mxu0 %v267
    %310 = vmatprep.subr.mxu0 0.0
    %311 = vmatpush1.msra.mxu0 %v266
    %312 = vmatprep.subr.mxu0 0.0
    %313 = vmatpush1.msra.mxu0 %v265
    %314 = vmatprep.subr.mxu0 0.0
    %315 = vmatpush1.msra.mxu0 %v264
    %316 = vmatprep.subr.mxu0 0.0
    %317 = vmatpush1.msra.mxu0 %v263
    %318 = vmatprep.subr.mxu0 0.0
    %319 = vmatpush2.msra.mxu0 0.0
    %320 = vmatprep.subr.mxu0 0.0
    %321 = vmatpush2.msra.mxu0 0.0
    %322 = vmatprep.subr.mxu0 0.0
    %323 = vmatpush2.msra.mxu0 0.0
    %324 = vmatprep.subr.mxu0 0.0
    %325 = vmatpush2.msra.mxu0 0.0
    %326 = vmatprep.subr.mxu0 0.0
    %327 = vmatpush2.msra.mxu0 0.0
    %328 = vmatprep.subr.mxu0 0.0
    %329 = vmatpush2.msra.mxu0 0.0
    %330 = vmatprep.subr.mxu0 0.0
    %331 = vmatpush2.msra.mxu0 0.0
    %332 = vmatprep.subr.mxu0 0.0
    %333 = vmatpush2.msra.mxu0 0.0
    %334 = vmatprep.subr.mxu0 0.0
    %335 = vmatpush2.msra.mxu0 0.0
    %336 = vmatprep.subr.mxu0 0.0
    %337 = vmatpush2.msra.mxu0 0.0
    %338 = vmatprep.subr.mxu0 0.0
    %339 = vmatpush2.msra.mxu0 0.0
    %340 = vmatprep.subr.mxu0 0.0
    %341 = vmatpush2.msra.mxu0 0.0
    %342 = vmatprep.subr.mxu0 0.0
    %343 = vmatpush2.msra.mxu0 0.0
    %344 = vmatprep.subr.mxu0 0.0
    %345 = vmatpush2.msra.mxu0 0.0
    %346 = vmatprep.subr.mxu0 0.0
    %347 = vmatpush2.msra.mxu0 0.0
    %348 = vmatprep.subr.mxu0 0.0
    %349 = vmatpush2.msra.mxu0 0.0
    %350 = vmatprep.mubr.f32.mxu0 0.0
    %351 = vmatmul.mubr.f32.gmra.mxu0 %v261
    %v352 = vpop.f32.mrf.mxu0
    %v353 = vadd.f32 %v284, %v352
    %v354 = vpop.f32.mrf.mxu0
    %355 = vmatprep.mubr.f32.mxu0 0.0
    %356 = vmatmul.mubr.f32.gmra.mxu0 %v262
    %v357 = vpop.f32.mrf.mxu0
    %v358 = vadd.f32 %v284, %v357
    %v359 = vpop.f32.mrf.mxu0
    %360 = vdwg.mxu0
    %vm361 = vcmp.eq.s32.totalorder %v257, 4
    %v362 = vsel %vm361, %v250, %v353
    %v363 = vsel %vm361, %v252, %v358
    %364 = vst.msk [vmem:[%s8] sm:$0xff] %vm67, %v362
    %365 = vst.msk [vmem:[%s8 + $0x8] sm:$0xff] %vm67, %v363
    // Predicated region
    $region42: #{tpu_custom_call.1} parent=1 // pred_check
      _
    $region43: #{tpu_custom_call.1} parent=1 // pred_check_branch
      %367 = sbr.rel (0) target = $region45
    $region44: #{tpu_custom_call.1} parent=1 // pred_region
      _
    $region45: #{tpu_custom_call.1} parent=1 // pred_fallthru
      _
    // Predicated region
    $region46: #{tpu_custom_call.1} parent=1 // pred_check
      _
    $region47: #{tpu_custom_call.1} parent=1 // pred_check_branch
      %369 = sbr.rel (0) target = $region49
    $region48: #{tpu_custom_call.1} parent=1 // pred_region
      _
    $region49: #{tpu_custom_call.1} parent=1 // pred_fallthru
      _
    %370 = vsyncpa [#allocation3], 1
    %371 = vsyncpa [#allocation5], 1

</llo_original>
